<compile_context>
chip_gen: v5e
topology: v5e:2x2
jax: 0.10.0
libtpu: 0.0.40
codegen_flags: <defaults>
</compile_context>

<pallas_src>
import functools

import jax
import jax.numpy as jnp
from jax.experimental import pallas as pl
from jax.experimental.pallas import tpu as pltpu

TRIPLET_MARGIN = 0.5
_PAIRWISE_EPS = 1e-6  # matches torch.nn.functional.pairwise_distance default eps


def _pick_tile_n(n: int, d: int, itemsize: int, target_bytes: int) -> int:
    """Rows per input block: ~target_bytes per block, dtype-aligned, or full N."""
    # Sublane alignment: 8 rows for 4-byte dtypes, 16 for bf16, 32 for int8/fp8.
    align = max(8, 32 // max(1, itemsize))
    rows = max(align, target_bytes // max(1, d * itemsize))
    rows = (rows // align) * align
    if rows >= n:
        return n  # single full block; no divisibility requirement on N
    return rows


def _triplet_loss_kernel(a_ref, p_ref, n_ref, out_ref, *, valid_rows_last):
    a = a_ref[...].astype(jnp.float32)
    p = p_ref[...].astype(jnp.float32)
    n = n_ref[...].astype(jnp.float32)

    # Euclidean pairwise distance per row (torch pairwise_distance eps semantics).
    dp = jnp.sqrt(jnp.sum((a - p + _PAIRWISE_EPS) ** 2, axis=-1, keepdims=True))
    dn = jnp.sqrt(jnp.sum((a - n + _PAIRWISE_EPS) ** 2, axis=-1, keepdims=True))
    losses = jnp.maximum(dp - dn + TRIPLET_MARGIN, 0.0)  # (tile_n, 1)

    if valid_rows_last is None:
        # N is a multiple of tile_n: unmasked fast path on every block.
        out_ref[0, 0] = jnp.sum(losses)
    else:
        i = pl.program_id(0)
        last = pl.num_programs(0) - 1

        @pl.when(i != last)
        def _():
            out_ref[0, 0] = jnp.sum(losses)

        @pl.when(i == last)
        def _():
            # Padded tail rows may hold arbitrary garbage (even NaN/inf);
            # mask by select so they cannot contribute to the sum.
            row = jax.lax.broadcasted_iota(jnp.int32, losses.shape, 0)
            out_ref[0, 0] = jnp.sum(
                jnp.where(row < valid_rows_last, losses, 0.0))


def triplet_loss(rep_anchor, rep_positive, rep_negative,
                 *, target_block_bytes: int = 4 * 1024 * 1024):
    """Scalar triplet loss (EUCLIDEAN, margin=0.5) via a tiled Pallas kernel."""
    assert rep_anchor.shape == rep_positive.shape == rep_negative.shape
    N, D = rep_anchor.shape
    itemsize = jnp.dtype(rep_anchor.dtype).itemsize

    tile_n = _pick_tile_n(N, D, itemsize, target_block_bytes)
    num_blocks = pl.cdiv(N, tile_n)
    rem = N % tile_n
    valid_rows_last = rem if rem != 0 else None

    in_spec = pl.BlockSpec((tile_n, D), lambda i: (i, 0))
    partials = pl.pallas_call(
        functools.partial(_triplet_loss_kernel,
                          valid_rows_last=valid_rows_last),
        out_shape=jax.ShapeDtypeStruct((num_blocks, 1), jnp.float32),
        grid=(num_blocks,),
        in_specs=[in_spec, in_spec, in_spec],
        # One scalar partial per grid step (no carried state) -> axis is
        # "parallel" and can shard across v7x's two TensorCores.
        out_specs=pl.BlockSpec((1, 1), lambda i: (i, 0),
                               memory_space=pltpu.SMEM),
        compiler_params=pltpu.CompilerParams(
            dimension_semantics=("parallel",),
            # 3 inputs x 2 buffers x <=4 MiB block = <=24 MiB + headroom;
            # under v7x's 64 MiB physical VMEM, above v5e's 16 MiB default.
            vmem_limit_bytes=40 * 1024 * 1024,
        ),
    )(rep_anchor, rep_positive, rep_negative)

    # Tiny final reduction + mean in XLA.
    return jnp.sum(partials) / jnp.float32(N)


def _reference_triplet_loss(a, p, n):
    a = a.astype(jnp.float32)
    p = p.astype(jnp.float32)
    n = n.astype(jnp.float32)
    dp = jnp.sqrt(jnp.sum((a - p + _PAIRWISE_EPS) ** 2, axis=-1))
    dn = jnp.sqrt(jnp.sum((a - n + _PAIRWISE_EPS) ** 2, axis=-1))
    return jnp.mean(jnp.maximum(dp - dn + TRIPLET_MARGIN, 0.0))


if __name__ == "__main__":
    # Test 1: the small module-shaped case (batch=8 triplets, hidden=32),
    # single full block.
    k_a, k_p, k_n = jax.random.split(jax.random.PRNGKey(0), 3)
    N, D = 8, 32
    rep_anchor = jax.random.normal(k_a, (N, D), dtype=jnp.float32)
    rep_positive = jax.random.normal(k_p, (N, D), dtype=jnp.float32)
    rep_negative = jax.random.normal(k_n, (N, D), dtype=jnp.float32)

    loss = triplet_loss(rep_anchor, rep_positive, rep_negative)
    jax.block_until_ready(loss)
    ref = _reference_triplet_loss(rep_anchor, rep_positive, rep_negative)
    assert jnp.allclose(loss, ref, atol=1e-5, rtol=1e-5), (loss, ref)

    # Test 2: exercises the multi-block "parallel" grid + tail-row masking
    # (N not a multiple of the tile) using a small per-block byte target.
    k_a2, k_p2, k_n2 = jax.random.split(jax.random.PRNGKey(1), 3)
    N2, D2 = 300, 256
    a2 = jax.random.normal(k_a2, (N2, D2), dtype=jnp.float32)
    p2 = jax.random.normal(k_p2, (N2, D2), dtype=jnp.float32)
    n2 = jax.random.normal(k_n2, (N2, D2), dtype=jnp.float32)

    loss2 = triplet_loss(a2, p2, n2, target_block_bytes=64 * 1024)
    jax.block_until_ready(loss2)
    ref2 = _reference_triplet_loss(a2, p2, n2)
    assert jnp.allclose(loss2, ref2, atol=1e-5, rtol=1e-4), (loss2, ref2)

    print("KERNEL_OK")
</pallas_src>

<mosaic_0001>
module attributes {stable_mosaic.version = 11 : i64} {
  func.func @_triplet_loss_kernel(%arg0: i32, %arg1: memref<8x32xf32, #tpu.memory_space<vmem>>, %arg2: memref<8x32xf32, #tpu.memory_space<vmem>>, %arg3: memref<8x32xf32, #tpu.memory_space<vmem>>, %arg4: memref<1x1xf32, #tpu.memory_space<smem>>) attributes {dimension_semantics = [#tpu.dimension_semantics<parallel>], iteration_bounds = array<i64: 1>, scalar_prefetch = 0 : i64, scratch_operands = 0 : i64, tpu.core_type = #tpu.core_type<tc>, window_params = [{transform_indices = @transform_0, window_bounds = array<i64: 8, 32>}, {transform_indices = @transform_1, window_bounds = array<i64: 8, 32>}, {transform_indices = @transform_2, window_bounds = array<i64: 8, 32>}, {transform_indices = @transform_3, window_bounds = array<i64: 1, 1>}]} {
    %c0 = arith.constant 0 : index
    %c0_0 = arith.constant 0 : index
    %0 = vector.load %arg1[%c0, %c0_0] : memref<8x32xf32, #tpu.memory_space<vmem>>, vector<8x32xf32>
    %c0_1 = arith.constant 0 : index
    %c0_2 = arith.constant 0 : index
    %1 = vector.load %arg2[%c0_1, %c0_2] : memref<8x32xf32, #tpu.memory_space<vmem>>, vector<8x32xf32>
    %c0_3 = arith.constant 0 : index
    %c0_4 = arith.constant 0 : index
    %2 = vector.load %arg3[%c0_3, %c0_4] : memref<8x32xf32, #tpu.memory_space<vmem>>, vector<8x32xf32>
    %3 = arith.subf %0, %1 : vector<8x32xf32>
    %cst = arith.constant 9.99999997E-7 : f32
    %4 = vector.broadcast %cst : f32 to vector<8x32xf32>
    %5 = arith.addf %3, %4 : vector<8x32xf32>
    %6 = arith.mulf %5, %5 : vector<8x32xf32>
    %cst_5 = arith.constant dense<0.000000e+00> : vector<8xf32>
    %7 = vector.multi_reduction <add>, %6, %cst_5 [1] : vector<8x32xf32> to vector<8xf32>
    %8 = vector.shape_cast %7 : vector<8xf32> to vector<8x1xf32>
    %9 = math.sqrt %8 : vector<8x1xf32>
    %10 = arith.subf %0, %2 : vector<8x32xf32>
    %cst_6 = arith.constant 9.99999997E-7 : f32
    %11 = vector.broadcast %cst_6 : f32 to vector<8x32xf32>
    %12 = arith.addf %10, %11 : vector<8x32xf32>
    %13 = arith.mulf %12, %12 : vector<8x32xf32>
    %cst_7 = arith.constant dense<0.000000e+00> : vector<8xf32>
    %14 = vector.multi_reduction <add>, %13, %cst_7 [1] : vector<8x32xf32> to vector<8xf32>
    %15 = vector.shape_cast %14 : vector<8xf32> to vector<8x1xf32>
    %16 = math.sqrt %15 : vector<8x1xf32>
    %17 = arith.subf %9, %16 : vector<8x1xf32>
    %cst_8 = arith.constant 5.000000e-01 : f32
    %18 = vector.broadcast %cst_8 : f32 to vector<8x1xf32>
    %19 = arith.addf %17, %18 : vector<8x1xf32>
    %cst_9 = arith.constant 0.000000e+00 : f32
    %20 = vector.broadcast %cst_9 : f32 to vector<8x1xf32>
    %21 = arith.maximumf %19, %20 : vector<8x1xf32>
    %22 = vector.shape_cast %21 : vector<8x1xf32> to vector<1x8x1xf32>
    %cst_10 = arith.constant dense<0.000000e+00> : vector<1xf32>
    %23 = vector.multi_reduction <add>, %22, %cst_10 [1, 2] : vector<1x8x1xf32> to vector<1xf32>
    %24 = vector.shape_cast %23 : vector<1xf32> to vector<1x1x1xf32>
    %25 = vector.extract %24[0, 0, 0] : f32 from vector<1x1x1xf32>
    %c0_11 = arith.constant 0 : index
    %c0_12 = arith.constant 0 : index
    %26 = memref.load %arg4[%c0_11, %c0_12] : memref<1x1xf32, #tpu.memory_space<smem>>
    memref.store %25, %arg4[%c0_11, %c0_12] : memref<1x1xf32, #tpu.memory_space<smem>>
    return
  }
  func.func @transform_0(%arg0: i32) -> (i32, i32) {
    %c0_i32 = arith.constant 0 : i32
    %c0_i32_0 = arith.constant 0 : i32
    return %arg0, %c0_i32 : i32, i32
  }
  func.func @transform_1(%arg0: i32) -> (i32, i32) {
    %c0_i32 = arith.constant 0 : i32
    %c0_i32_0 = arith.constant 0 : i32
    return %arg0, %c0_i32 : i32, i32
  }
  func.func @transform_2(%arg0: i32) -> (i32, i32) {
    %c0_i32 = arith.constant 0 : i32
    %c0_i32_0 = arith.constant 0 : i32
    return %arg0, %c0_i32 : i32, i32
  }
  func.func @transform_3(%arg0: i32) -> (i32, i32) {
    %c0_i32 = arith.constant 0 : i32
    %c0_i32_0 = arith.constant 0 : i32
    return %arg0, %c0_i32 : i32, i32
  }
}

</mosaic_0001>

<llo_original>
// kernel: tpu_custom_call.1
$region0: #{tpu_custom_call.1}
  #allocation0 [shape = 'u32[]', space=smem, size = 0x4, offset = 0x4, fixed_abs, tag = 'smem constant byte address 0x4 - core index']
  #allocation1 [shape = 'u32[72,128]{1,0:T(1,128)}', space=vmem, size = 0x9000, scoped, tag = 'internal scratch']
  %s0 = inlined_call_operand.hbm [shape: f32[8,32], index: 0, kind: input, shape index: {}]
  %s1 = inlined_call_operand.hbm [shape: f32[8,32], index: 1, kind: input, shape index: {}]
  %s2 = inlined_call_operand.hbm [shape: f32[8,32], index: 2, kind: input, shape index: {}]
  %s3 = inlined_call_operand.hbm [shape: f32[1,1], index: 3, kind: output, shape index: {}]
  %s4 = sld [smem:[#allocation0]]
  $region34: #{tpu_custom_call.1} parent=0
    _
  %s6 = ssub.s32 1, %s4
  %s7 = scalar_select 0, %s6, %s4
  $region1: #{tpu_custom_call.1} parent=0
    #allocation2 [shape = 'u8[4096]{0}', space=vmem, size = 0x1000, scoped, tag = 'input window, operand 0, single buffered']
    #allocation3 [shape = 's32[1]{0}', space=sflag, size = 0x4, scoped, tag = 'scoped memory for tpu_custom_call.1']
    #allocation4 [shape = 's32[1]{0}', space=sflag, size = 0x4, scoped, tag = 'scoped memory for tpu_custom_call.1']
    #allocation5 [shape = 'u8[4096]{0}', space=vmem, size = 0x1000, scoped, tag = 'input window, operand 1, single buffered']
    #allocation6 [shape = 's32[1]{0}', space=sflag, size = 0x4, scoped, tag = 'scoped memory for tpu_custom_call.1']
    #allocation7 [shape = 'u8[4096]{0}', space=vmem, size = 0x1000, scoped, tag = 'input window, operand 2, single buffered']
    #allocation8 [shape = 'u8[512]{0}', space=smem, size = 0x200, scoped, tag = 'output window, operand 0, single buffered']
    %8 = vsyncpa [#allocation3], 0
    %9 = vsyncpa [#allocation6], 0
    %10 = vsyncpa [#allocation4], 0
    // Predicated region
    $region2: #{tpu_custom_call.1} parent=1 // pred_check
      _
    $region3: #{tpu_custom_call.1} parent=1 // pred_check_branch
      %12 = sbr.rel (0) target = $region5
    $region4: #{tpu_custom_call.1} parent=1 // pred_region
      %14 = vsyncadd [#allocation3], 0
      %s16 = sshll.u32 %s0, 4
      %s17 = int_to_ptr.hbm [resolvable:$true] %s16
      %s18 = sshll.u32 [#allocation2], 4
      %s19 = int_to_ptr.vmem [resolvable:$true] %s18
      %21 = dma.hbm_to_vmem [thread:$0]  %s17, 128, %s19, [#allocation3]
    $region5: #{tpu_custom_call.1} parent=1 // pred_fallthru
      _
    // Predicated region
    $region6: #{tpu_custom_call.1} parent=1 // pred_check
      _
    $region7: #{tpu_custom_call.1} parent=1 // pred_check_branch
      %23 = sbr.rel (0) target = $region9
    $region8: #{tpu_custom_call.1} parent=1 // pred_region
      %25 = vsyncadd [#allocation6], 0
      %s27 = sshll.u32 %s1, 4
      %s28 = int_to_ptr.hbm [resolvable:$true] %s27
      %s29 = sshll.u32 [#allocation5], 4
      %s30 = int_to_ptr.vmem [resolvable:$true] %s29
      %32 = dma.hbm_to_vmem [thread:$0]  %s28, 128, %s30, [#allocation6]
    $region9: #{tpu_custom_call.1} parent=1 // pred_fallthru
      _
    // Predicated region
    $region10: #{tpu_custom_call.1} parent=1 // pred_check
      _
    $region11: #{tpu_custom_call.1} parent=1 // pred_check_branch
      %34 = sbr.rel (0) target = $region13
    $region12: #{tpu_custom_call.1} parent=1 // pred_region
      %36 = vsyncadd [#allocation6], 0
      %s38 = sshll.u32 %s2, 4
      %s39 = int_to_ptr.hbm [resolvable:$true] %s38
      %s40 = sshll.u32 [#allocation7], 4
      %s41 = int_to_ptr.vmem [resolvable:$true] %s40
      %43 = dma.hbm_to_vmem [thread:$0]  %s39, 128, %s41, [#allocation6]
    $region13: #{tpu_custom_call.1} parent=1 // pred_fallthru
      _
    // Predicated region
    $region14: #{tpu_custom_call.1} parent=1 // pred_check
      _
    $region15: #{tpu_custom_call.1} parent=1 // pred_check_branch
      %45 = sbr.rel (0) target = $region17
    $region16: #{tpu_custom_call.1} parent=1 // pred_region
      %47 = dma.done [#allocation3], 128
    $region17: #{tpu_custom_call.1} parent=1 // pred_fallthru
      _
    // Predicated region
    $region18: #{tpu_custom_call.1} parent=1 // pred_check
      _
    $region19: #{tpu_custom_call.1} parent=1 // pred_check_branch
      %49 = sbr.rel (0) target = $region21
    $region20: #{tpu_custom_call.1} parent=1 // pred_region
      %51 = dma.done [#allocation6], 128
    $region21: #{tpu_custom_call.1} parent=1 // pred_fallthru
      _
    // Predicated region
    $region22: #{tpu_custom_call.1} parent=1 // pred_check
      _
    $region23: #{tpu_custom_call.1} parent=1 // pred_check_branch
      %53 = sbr.rel (0) target = $region25
    $region24: #{tpu_custom_call.1} parent=1 // pred_region
      %55 = dma.done [#allocation6], 128
    $region25: #{tpu_custom_call.1} parent=1 // pred_fallthru
      _
    %v56 = vld [vmem:[#allocation2] sm:$0xff]
    %v57 = vld [vmem:[#allocation5] sm:$0xff]
    %v58 = vld [vmem:[#allocation7] sm:$0xff]
    %v59 = vsub.f32 %v56, %v57
    %v60 = vadd.f32 %v59, 1e-06
    %v61 = vmul.f32 %v60, %v60
    %vm62 = vcmask 261120
    %v63 = vsel %vm62, %v61, 0.0
    %64 = vadd.xlane.f32.xlu0 %v63
    %v65 = vpop.xlane.xlu0 %64
    %v66 = vrsqrt.pop %v65
    %v67 = vmul.f32 %v66, %v65
    %v68 = vmul.f32 %v67, %v66
    %v69 = vmul.f32 0.5, %v68
    %v70 = vsub.f32 1.5, %v69
    %v71 = vmul.f32 %v66, %v70
    %v72 = vmul.f32 %v65, %v71
    %vm73 = vcmp.eq.f32.partialorder %v65, inf
    %v74 = vsel %vm73, %v65, %v72
    %vm75 = vcmp.eq.f32.partialorder %v65, 0.0
    %v76 = vand.u32 %v65, 2147483648
    %v77 = vsel %vm75, %v76, %v74
    %v78 = vsub.f32 %v56, %v58
    %v79 = vadd.f32 %v78, 1e-06
    %v80 = vmul.f32 %v79, %v79
    %v81 = vsel %vm62, %v80, 0.0
    %82 = vadd.xlane.f32.xlu0 %v81
    %v83 = vpop.xlane.xlu0 %82
    %v84 = vrsqrt.pop %v83
    %v85 = vmul.f32 %v84, %v83
    %v86 = vmul.f32 %v85, %v84
    %v87 = vmul.f32 0.5, %v86
    %v88 = vsub.f32 1.5, %v87
    %v89 = vmul.f32 %v84, %v88
    %v90 = vmul.f32 %v83, %v89
    %vm91 = vcmp.eq.f32.partialorder %v83, inf
    %v92 = vsel %vm91, %v83, %v90
    %vm93 = vcmp.eq.f32.partialorder %v83, 0.0
    %v94 = vand.u32 %v83, 2147483648
    %v95 = vsel %vm93, %v94, %v92
    %v96 = vsub.f32 %v77, %v95
    %v97 = vadd.f32 %v96, 0.5
    %v98 = vmax.f32 %v97, 0.0
    %vm99 = vcmask 7168
    %v100 = vsel %vm99, %v98, 0.0
    %101 = vadd.xlane.f32.xlu0 %v100
    %v102 = vpop.xlane.xlu0 %101
    %v103 = vrot.slane %v102, 4
    %v104 = vadd.f32 %v102, %v103
    %v105 = vrot.slane %v104, 2
    %v106 = vadd.f32 %v104, %v105
    %v107 = vrot.slane %v106, 1
    %v108 = vadd.f32 %v106, %v107
    %s109 = vtos %v108
    %s110 = scalar_lea.smem [#allocation8], 0
    %111 = sst [smem:[%s110]] %s109
    // Predicated region
    $region26: #{tpu_custom_call.1} parent=1 // pred_check
      _
    $region27: #{tpu_custom_call.1} parent=1 // pred_check_branch
      %113 = sbr.rel (0) target = $region29
    $region28: #{tpu_custom_call.1} parent=1 // pred_region
      %115 = vsyncadd [#allocation4], 0
      %s117 = sshll.u32 %s3, 4
      %s118 = int_to_ptr.hbm [resolvable:$true] %s117
      %120 = dma.smem_to_hbm [#allocation8], 16, %s118, [#allocation4]
    $region29: #{tpu_custom_call.1} parent=1 // pred_fallthru
      _
    // Predicated region
    $region30: #{tpu_custom_call.1} parent=1 // pred_check
      _
    $region31: #{tpu_custom_call.1} parent=1 // pred_check_branch
      %122 = sbr.rel (0) target = $region33
    $region32: #{tpu_custom_call.1} parent=1 // pred_region
      %124 = dma.done [#allocation4], 16
    $region33: #{tpu_custom_call.1} parent=1 // pred_fallthru
      _
    %125 = sfence
    %126 = vsyncpa [#allocation3], 1
    %127 = vsyncpa [#allocation6], 1
    %128 = vsyncpa [#allocation4], 1

</llo_original>
